<compile_context>
chip_gen: v6e
topology: v6e:2x2x1
jax: 0.10.0
libtpu: 0.0.40
codegen_flags: <defaults>
</compile_context>

<pallas_src>
import math
import functools

import jax
import jax.numpy as jnp
from jax.experimental import pallas as pl
from jax.experimental.pallas import tpu as pltpu


# ----------------------------------------------------------------------------
# Kernel: elementwise add of the (VMEM-resident) PE row + optional inverted
# dropout, on a lane-dense (TILE_ROWS, T*H) tile.
# ----------------------------------------------------------------------------
def _posenc_kernel(seed_ref, x_ref, pe_ref, o_ref, *, p, training):
    # x_ref: (TILE_ROWS, T*H); pe_ref: (1, T*H) -> broadcast over rows (sublanes).
    y = x_ref[...] + pe_ref[...]
    if training and p > 0.0:
        # Inverted dropout: keep with prob (1-p), scale kept values by 1/(1-p).
        pltpu.prng_seed(seed_ref[0], pl.program_id(0))  # per-tile stream
        bits = pltpu.bitcast(pltpu.prng_random_bits(y.shape), jnp.uint32)
        thresh = jnp.uint32(min(int(p * float(2 ** 32)), 2 ** 32 - 1))
        keep = bits >= thresh
        y = jnp.where(keep, y * (1.0 / (1.0 - p)), jnp.zeros_like(y))
    o_ref[...] = y.astype(o_ref.dtype)


def _choose_tile_rows(num_rows, row_len, itemsize, target_bytes=2 * 1024 * 1024):
    """~2 MiB per buffer: safe vs. scoped VMEM on v5e/v6e/v7x with double-buffering."""
    rows = max(1, target_bytes // max(1, row_len * itemsize))
    if rows >= num_rows:
        return num_rows                    # whole array in a single block
    return max(8, (rows // 8) * 8)         # keep sublane (2nd-minor) dim 8-aligned


def positional_encoding_forward(x, pe, *, p=0.0, training=False, seed=0):
    """x: (B, T, H), pe: (1, T, H).  Returns dropout(x + pe), shape (B, T, H)."""
    B, T, H = x.shape
    assert pe.shape == (1, T, H)
    row_len = T * H

    # Lane-dense 2D views (free reshapes on contiguous row-major data).
    x2 = x.reshape(B, row_len)
    pe2 = pe.reshape(1, row_len)

    tile_rows = _choose_tile_rows(B, row_len, x.dtype.itemsize)
    grid = (pl.cdiv(B, tile_rows),)

    seed_arr = jnp.array([seed], dtype=jnp.int32)
    kernel = functools.partial(_posenc_kernel, p=float(p), training=bool(training))

    grid_spec = pltpu.PrefetchScalarGridSpec(
        num_scalar_prefetch=1,
        grid=grid,
        in_specs=[
            pl.BlockSpec((tile_rows, row_len), lambda i, seed: (i, 0)),  # x row tile
            pl.BlockSpec((1, row_len), lambda i, seed: (0, 0)),          # pe: constant
                                                                         # index -> VMEM
                                                                         # resident
        ],
        out_specs=pl.BlockSpec((tile_rows, row_len), lambda i, seed: (i, 0)),
    )

    out2 = pl.pallas_call(
        kernel,
        out_shape=jax.ShapeDtypeStruct((B, row_len), x.dtype),
        grid_spec=grid_spec,
        compiler_params=pltpu.CompilerParams(
            dimension_semantics=("parallel",),       # row tiles split across TCs (v7x)
            vmem_limit_bytes=32 * 1024 * 1024,       # explicit, safe on v5e/v6e/v7x
        ),
    )(seed_arr, x2, pe2)

    return out2.reshape(B, T, H)


# ----------------------------------------------------------------------------
# Deterministic parameter setup (mirrors the PyTorch __init__ buffer).
# ----------------------------------------------------------------------------
def make_pe_table(tokens_len, num_embed_hidden):
    pe = jnp.zeros((tokens_len, num_embed_hidden), dtype=jnp.float32)
    position = jnp.arange(0, tokens_len, dtype=jnp.float32)[:, None]
    div_term = jnp.exp(
        jnp.arange(0, num_embed_hidden, 2, dtype=jnp.float32)
        * (-math.log(10000.0) / num_embed_hidden)
    )
    pe = pe.at[:, 0::2].set(jnp.sin(position * div_term))
    pe = pe.at[:, 1::2].set(jnp.cos(position * div_term))
    return pe[None, :, :]  # (1, T, H)


if __name__ == "__main__":
    # Small config consistent with the module: tokens_len=8, num_embed_hidden=32.
    batch, tokens_len, num_embed_hidden = 2, 8, 32
    dropout_p = 0.1

    key = jax.random.PRNGKey(0)
    x = jax.random.normal(key, (batch, tokens_len, num_embed_hidden), dtype=jnp.float32)
    pe = make_pe_table(tokens_len, num_embed_hidden)

    # Eval-mode forward (dropout is identity), matches PyTorch module.eval().
    out = jax.block_until_ready(
        positional_encoding_forward(x, pe, p=dropout_p, training=False)
    )
    ref = x + pe  # broadcast over batch, exactly like x + self.pe[:x.size(0), :]
    assert out.shape == x.shape
    assert jnp.allclose(out, ref, atol=1e-6), "mismatch vs reference"

    # Training (dropout) path uses the TPU hardware PRNG, which has no CPU /
    # interpret lowering -> only exercise it when actually running on TPU.
    if jax.default_backend() == "tpu":
        out_tr = jax.block_until_ready(
            positional_encoding_forward(x, pe, p=dropout_p, training=True, seed=123)
        )
        assert out_tr.shape == x.shape
        # Every element is either dropped (0) or (x+pe)/(1-p).
        scaled_back = out_tr * (1.0 - dropout_p)
        ok = jnp.isclose(out_tr, 0.0) | jnp.isclose(scaled_back, ref, atol=1e-5)
        assert bool(jnp.all(ok)), "dropout output inconsistent with inverted dropout"

    print("KERNEL_OK")
</pallas_src>

<mosaic_0001>
module attributes {stable_mosaic.version = 11 : i64} {
  func.func @_posenc_kernel(%arg0: i32, %arg1: memref<1xi32, #tpu.memory_space<smem>>, %arg2: memref<2x256xf32, #tpu.memory_space<vmem>>, %arg3: memref<1x256xf32, #tpu.memory_space<vmem>>, %arg4: memref<2x256xf32, #tpu.memory_space<vmem>>) attributes {dimension_semantics = [#tpu.dimension_semantics<parallel>], iteration_bounds = array<i64: 1>, scalar_prefetch = 1 : i64, scratch_operands = 0 : i64, tpu.core_type = #tpu.core_type<tc>, window_params = [{transform_indices = @transform_0, window_bounds = array<i64: 2, 256>}, {pipeline_mode = #tpu.pipeline_mode<synchronous>, transform_indices = @transform_1, window_bounds = array<i64: 1, 256>}, {transform_indices = @transform_2, window_bounds = array<i64: 2, 256>}]} {
    %c0 = arith.constant 0 : index
    %c0_0 = arith.constant 0 : index
    %0 = vector.load %arg2[%c0, %c0_0] : memref<2x256xf32, #tpu.memory_space<vmem>>, vector<2x256xf32>
    %c0_1 = arith.constant 0 : index
    %c0_2 = arith.constant 0 : index
    %1 = vector.load %arg3[%c0_1, %c0_2] : memref<1x256xf32, #tpu.memory_space<vmem>>, vector<1x256xf32>
    %2 = vector.broadcast %1 : vector<1x256xf32> to vector<2x256xf32>
    %3 = arith.addf %0, %2 : vector<2x256xf32>
    %c0_3 = arith.constant 0 : index
    %c0_4 = arith.constant 0 : index
    %4 = vector.load %arg4[%c0_3, %c0_4] : memref<2x256xf32, #tpu.memory_space<vmem>>, vector<2x256xf32>
    tpu.vector_store %arg4[%c0_3, %c0_4], %3 {strides = array<i32>} : memref<2x256xf32, #tpu.memory_space<vmem>>, vector<2x256xf32>,
    return
  }
  func.func @transform_0(%arg0: i32, %arg1: memref<1xi32, #tpu.memory_space<smem>>) -> (i32, i32) {
    %c0_i32 = arith.constant 0 : i32
    %c0_i32_0 = arith.constant 0 : i32
    return %arg0, %c0_i32 : i32, i32
  }
  func.func @transform_1(%arg0: i32, %arg1: memref<1xi32, #tpu.memory_space<smem>>) -> (i32, i32) {
    %c0_i32 = arith.constant 0 : i32
    %c0_i32_0 = arith.constant 0 : i32
    %c0_i32_1 = arith.constant 0 : i32
    return %c0_i32, %c0_i32_0 : i32, i32
  }
  func.func @transform_2(%arg0: i32, %arg1: memref<1xi32, #tpu.memory_space<smem>>) -> (i32, i32) {
    %c0_i32 = arith.constant 0 : i32
    %c0_i32_0 = arith.constant 0 : i32
    return %arg0, %c0_i32 : i32, i32
  }
}

</mosaic_0001>

<llo_original>
// kernel: tpu_custom_call.1
$region0: #{tpu_custom_call.1}
  #allocation0 [shape = 'u32[]', space=smem, size = 0x4, offset = 0x4, fixed_abs, tag = 'smem constant byte address 0x4 - core index']
  #allocation1 [shape = 'u32[144,128]{1,0:T(1,128)}', space=vmem, size = 0x12000, scoped, tag = 'internal scratch']
  #allocation2 [shape = 's32[1]{0}', space=sflag, size = 0x4, scoped, tag = 'scoped memory for tpu_custom_call.1']
  #allocation3 [shape = 's32[1]{0:T(128)S(6)}', space=smem, size = 0x200, scoped, tag = 'prefetched SMEM operand 0']
  %s0 = inlined_call_operand.<no memory space> [shape: s32[1], index: 0, kind: input, shape index: {}]
  %s1 = inlined_call_operand.hbm [shape: f32[2,256], index: 1, kind: input, shape index: {}]
  %s2 = inlined_call_operand.vmem [shape: f32[1,256], index: 2, kind: input, shape index: {}]
  %s3 = inlined_call_operand.hbm [shape: f32[2,256], index: 3, kind: output, shape index: {}]
  %s4 = sld [smem:[#allocation0]]
  $region22: #{tpu_custom_call.1} parent=0
    _
  %s6 = ssub.s32 1, %s4
  %s7 = scalar_select 0, %s6, %s4
  %8 = sst [smem:[#allocation3]] %s0
  $region1: #{tpu_custom_call.1} parent=0
    #allocation4 [shape = 'u8[2048]{0}', space=vmem, size = 0x800, scoped, tag = 'input window, operand 1, single buffered']
    #allocation5 [shape = 's32[1]{0}', space=sflag, size = 0x4, scoped, tag = 'scoped memory for tpu_custom_call.1']
    #allocation6 [shape = 's32[1]{0}', space=sflag, size = 0x4, scoped, tag = 'scoped memory for tpu_custom_call.1']
    #allocation7 [shape = 'u8[2048]{0}', space=vmem, size = 0x800, scoped, tag = 'output window, operand 0, single buffered']
    %9 = vsyncpa [#allocation5], 0
    %10 = vsyncpa [#allocation6], 0
    // Predicated region
    $region2: #{tpu_custom_call.1} parent=1 // pred_check
      _
    $region3: #{tpu_custom_call.1} parent=1 // pred_check_branch
      %12 = sbr.rel (0) target = $region5
    $region4: #{tpu_custom_call.1} parent=1 // pred_region
      %s14 = ssub.s32 64, 64
      %15 = vsyncadd [#allocation5], %s14
      %s17 = sshll.u32 [#allocation4], 4
      %s18 = int_to_ptr.vmem [resolvable:$true] %s17
      %20 = dma.hbm_to_vmem [thread:$0]  %s1, 64, %s18, [#allocation5]
    $region5: #{tpu_custom_call.1} parent=1 // pred_fallthru
      _
    // Predicated region
    $region6: #{tpu_custom_call.1} parent=1 // pred_check
      _
    $region7: #{tpu_custom_call.1} parent=1 // pred_check_branch
      %22 = sbr.rel (0) target = $region9
    $region8: #{tpu_custom_call.1} parent=1 // pred_region
      _
    $region9: #{tpu_custom_call.1} parent=1 // pred_fallthru
      _
    // Predicated region
    $region10: #{tpu_custom_call.1} parent=1 // pred_check
      _
    $region11: #{tpu_custom_call.1} parent=1 // pred_check_branch
      %24 = sbr.rel (0) target = $region13
    $region12: #{tpu_custom_call.1} parent=1 // pred_region
      %25 = dma.done [#allocation5], 64
    $region13: #{tpu_custom_call.1} parent=1 // pred_fallthru
      _
    %v26 = vld [vmem:[#allocation4] sm:$0xf]
    %v27 = vld [vmem:[%s2] sm:$0x3]
    %v29 = vlaneseq
    %v30 = vshrl.u32 %v29, 7
    %v31 = vsub.s32 0, %v30
    %v32 = vrot.slane %v27, %v31
    %v33 = vlaneseq
    %v34 = vshrl.u32 %v33, 7
    %v35 = vsub.s32 1, %v34
    %v36 = vrot.slane %v27, %v35
    %v37 = vcombine.low %v32, %v36
    %v39 = vunpack.c.l.s4 1983009808
    %v40 = vunpack.c.0.s8 %v39
    %v41 = vlaneseq
    %v42 = vshrl.u32 %v41, 7
    %v43 = vsub.s32 %v40, %v42
    %v44 = vrot.slane %v37, %v43
    %v46 = vadd.f32 %v26, %v44
    %47 = vst [vmem:[#allocation7] sm:$0xf] %v46
    // Predicated region
    $region14: #{tpu_custom_call.1} parent=1 // pred_check
      _
    $region15: #{tpu_custom_call.1} parent=1 // pred_check_branch
      %49 = sbr.rel (0) target = $region17
    $region16: #{tpu_custom_call.1} parent=1 // pred_region
      %s51 = ssub.s32 64, 64
      %52 = vsyncadd [#allocation6], %s51
      %s54 = sshll.u32 [#allocation7], 4
      %s55 = int_to_ptr.vmem [resolvable:$true] %s54
      %57 = dma.vmem_to_hbm [thread:$0]  %s55, 64, %s3, [#allocation6]
    $region17: #{tpu_custom_call.1} parent=1 // pred_fallthru
      _
    // Predicated region
    $region18: #{tpu_custom_call.1} parent=1 // pred_check
      _
    $region19: #{tpu_custom_call.1} parent=1 // pred_check_branch
      %59 = sbr.rel (0) target = $region21
    $region20: #{tpu_custom_call.1} parent=1 // pred_region
      %60 = dma.done [#allocation6], 64
    $region21: #{tpu_custom_call.1} parent=1 // pred_fallthru
      _
    %61 = vsyncpa [#allocation5], 1
    %62 = vsyncpa [#allocation6], 1

</llo_original>
